<compile_context>
chip_gen: v5e
topology: v5e:2x2
jax: 0.10.0
libtpu: 0.0.40
codegen_flags: <defaults>
</compile_context>

<pallas_src>
import functools

import jax
import jax.numpy as jnp
from jax.experimental import pallas as pl
from jax.experimental.pallas import tpu as pltpu


def _round_up(x, m):
    return ((x + m - 1) // m) * m


@functools.lru_cache(maxsize=1)
def _vmem_capacity_bytes():
    """Physical VMEM per core; conservative 64 MiB (v7x) fallback."""
    try:
        return int(pltpu.get_tpu_info().vmem_capacity_bytes)
    except Exception:
        return 64 * 1024 * 1024


@functools.lru_cache(maxsize=1)
def _single_buffering_supported():
    """Feature-detect pl.Buffered(1) (single-buffered resident operands)."""
    try:
        def _probe(x_ref, o_ref):
            o_ref[...] = x_ref[...] + 1.0

        fn = pl.pallas_call(
            _probe,
            out_shape=jax.ShapeDtypeStruct((8, 128), jnp.float32),
            grid=(2,),
            in_specs=[pl.BlockSpec((8, 128), lambda i: (0, 0),
                                   pipeline_mode=pl.Buffered(1))],
            out_specs=pl.BlockSpec((8, 128), lambda i: (0, 0)),
            compiler_params=pltpu.CompilerParams(
                dimension_semantics=("arbitrary",)),
        )
        out = jax.block_until_ready(fn(jnp.ones((8, 128), jnp.float32)))
        return bool(jnp.all(out == 2.0))
    except Exception:
        return False


def _ffn_kernel(x_ref, w1_ref, b1_ref, w2_ref, b2_ref, o_ref, acc_ref):
    # x_ref : (tm, dim_p)       token tile (constant over the hidden axis)
    # w1_ref: (dim_p, tk_h)     slab of W1^T
    # b1_ref: (1, tk_h)
    # w2_ref: (tk_h, dim_p)     slab of W2^T
    # b2_ref: (1, dim_p)
    # o_ref : (tm, dim_p)
    # acc_ref: (tm, dim_p) f32  accumulator over hidden slabs
    k = pl.program_id(1)

    @pl.when(k == 0)
    def _init():
        acc_ref[...] = jnp.zeros_like(acc_ref)

    # First matmul: native-dtype inputs, f32 accumulation on the MXU.
    h = jnp.dot(x_ref[...], w1_ref[...], preferred_element_type=jnp.float32)
    h = h + b1_ref[...].astype(jnp.float32)

    # Exact GELU (torch.nn.GELU default): 0.5*x*(1+erf(x/sqrt(2)))
    h = 0.5 * h * (1.0 + jax.lax.erf(h * jnp.float32(0.7071067811865476)))

    # dropout(p=0.0) is the identity -> nothing to do.

    # Second matmul: accumulate this hidden slab's contribution in f32.
    acc_ref[...] += jnp.dot(h.astype(w2_ref.dtype), w2_ref[...],
                            preferred_element_type=jnp.float32)

    @pl.when(k == pl.num_programs(1) - 1)
    def _finalize():
        o_ref[...] = (acc_ref[...] + b2_ref[...].astype(jnp.float32)
                      ).astype(o_ref.dtype)


def prepare_ffn_params(w1, b1, w2, b2):
    """One-time weight prep: transpose + lane-dense zero padding.

    Call once and pass the result via `prepared=` to hoist this HBM traffic out
    of the per-call path. Zero padding is numerically exact (GELU(0)=0, padded
    weight rows/cols are zero, padded outputs are sliced off)."""
    hidden, dim = w1.shape
    dim_p = _round_up(dim, 128)
    hid_p = _round_up(hidden, 128)

    w1_t = jnp.asarray(w1).T                       # (dim, hidden)
    w2_t = jnp.asarray(w2).T                       # (hidden, dim)
    b1_row = jnp.asarray(b1).reshape(1, hidden)
    b2_row = jnp.asarray(b2).reshape(1, dim)
    if dim_p != dim or hid_p != hidden:
        w1_t = jnp.pad(w1_t, ((0, dim_p - dim), (0, hid_p - hidden)))
        w2_t = jnp.pad(w2_t, ((0, hid_p - hidden), (0, dim_p - dim)))
        b1_row = jnp.pad(b1_row, ((0, 0), (0, hid_p - hidden)))
        b2_row = jnp.pad(b2_row, ((0, 0), (0, dim_p - dim)))
    return (w1_t, b1_row, w2_t, b2_row, int(dim), int(hidden))


@functools.partial(
    jax.jit,
    static_argnames=("dim", "hidden", "tm", "single_buf", "vmem_cap"))
def _ffn_forward(x, w1_t, b1_row, w2_t, b2_row, *, dim, hidden, tm,
                 single_buf, vmem_cap):
    batch, seq, xdim = x.shape
    assert xdim == dim, "x feature dim does not match the weights"
    M = batch * seq
    dim_p, hid_p = w1_t.shape

    x_sz = jnp.dtype(x.dtype).itemsize
    w_sz = jnp.dtype(w1_t.dtype).itemsize
    o_sz = x_sz

    # ---- token tile --------------------------------------------------------
    tm_eff = max(8, min(tm, _round_up(M, 8)))
    # v7x has 2 TensorCores; give the "parallel" axis >= 2 steps when possible.
    if _round_up(M, tm_eff) // tm_eff < 2 and M > 8:
        tm_eff = max(8, _round_up((M + 1) // 2, 8))

    # ---- VMEM planning -----------------------------------------------------
    budget = int(vmem_cap * 3 // 4)

    def vmem_needed(tm_e, tk, nk_):
        wbuf = 1 if (nk_ == 1 and single_buf) else 2
        weights = 2 * dim_p * tk * w_sz * wbuf          # W1^T + W2^T slabs
        biases = (tk + dim_p) * w_sz * wbuf
        x_tiles = tm_e * dim_p * x_sz * 2               # double-buffered x tile
        o_tiles = tm_e * dim_p * o_sz * 2               # double-buffered out tile
        acc = tm_e * dim_p * 4                          # f32 accumulator scratch
        interm = 2 * tm_e * tk * 4                      # f32 h (+ cast headroom)
        return weights + biases + x_tiles + o_tiles + acc + interm

    # Split the hidden axis into nk slabs (multiples of 128 dividing hid_p)
    # only when the fully-resident plan does not fit the budget.
    tk_h, nk = hid_p, 1
    if vmem_needed(tm_eff, tk_h, nk) > budget:
        lanes = hid_p // 128
        for cand_nk in range(2, lanes + 1):
            if lanes % cand_nk:
                continue
            cand_tk = hid_p // cand_nk
            if vmem_needed(tm_eff, cand_tk, cand_nk) <= budget:
                tk_h, nk = cand_tk, cand_nk
                break
        else:
            tk_h, nk = 128, lanes
    # Last resort: shrink the token tile.
    while vmem_needed(tm_eff, tk_h, nk) > budget and tm_eff > 64:
        tm_eff = max(64, tm_eff // 2)

    M_pad = _round_up(M, tm_eff)
    num_m = M_pad // tm_eff

    needed = vmem_needed(tm_eff, tk_h, nk)
    vmem_limit = int(min(max(needed * 5 // 4, 16 * 1024 * 1024) + (2 << 20),
                         vmem_cap * 9 // 10))

    # ---- activations (pad only when it is not a no-op) ----------------------
    x2d = x.reshape(M, dim)
    if M_pad != M or dim_p != dim:
        x2d = jnp.pad(x2d, ((0, M_pad - M), (0, dim_p - dim)))

    weight_kwargs = {}
    if nk == 1 and single_buf:
        # Resident weights: single buffer (index map is constant -> no re-DMA).
        weight_kwargs = dict(pipeline_mode=pl.Buffered(1))

    cost = pl.CostEstimate(
        flops=4 * M_pad * dim_p * hid_p,
        transcendentals=M_pad * hid_p,
        bytes_accessed=(M_pad * dim_p * (x_sz + o_sz)
                        + (2 * dim_p * hid_p + hid_p + dim_p) * w_sz
                        * (1 if nk == 1 else num_m)),
    )

    out2d = pl.pallas_call(
        _ffn_kernel,
        out_shape=jax.ShapeDtypeStruct((M_pad, dim_p), x.dtype),
        grid_spec=pltpu.PrefetchScalarGridSpec(
            num_scalar_prefetch=0,
            grid=(num_m, nk),
            in_specs=[
                pl.BlockSpec((tm_eff, dim_p), lambda i, k: (i, 0)),      # x tile
                pl.BlockSpec((dim_p, tk_h), lambda i, k: (0, k),
                             **weight_kwargs),                            # W1^T
                pl.BlockSpec((1, tk_h), lambda i, k: (0, k),
                             **weight_kwargs),                            # b1
                pl.BlockSpec((tk_h, dim_p), lambda i, k: (k, 0),
                             **weight_kwargs),                            # W2^T
                pl.BlockSpec((1, dim_p), lambda i, k: (0, 0),
                             **weight_kwargs),                            # b2
            ],
            out_specs=pl.BlockSpec((tm_eff, dim_p), lambda i, k: (i, 0)),
            scratch_shapes=[pltpu.VMEM((tm_eff, dim_p), jnp.float32)],
        ),
        compiler_params=pltpu.CompilerParams(
            dimension_semantics=("parallel", "arbitrary"),
            vmem_limit_bytes=vmem_limit,
        ),
        cost_estimate=cost,
    )(x2d, w1_t, b1_row, w2_t, b2_row)

    if M_pad != M or dim_p != dim:
        out2d = out2d[:M, :dim]
    return out2d.reshape(batch, seq, dim)


def feed_forward_active(x, w1, b1, w2, b2, *, tm=512, prepared=None):
    """x: (batch, seq, dim); w1: (hidden, dim); b1: (hidden,);
    w2: (dim, hidden); b2: (dim,). Returns (batch, seq, dim).

    Pass `prepared=prepare_ffn_params(w1, b1, w2, b2)` to hoist the one-time
    weight transpose/padding out of the per-call path."""
    if prepared is None:
        prepared = prepare_ffn_params(w1, b1, w2, b2)
    w1_t, b1_row, w2_t, b2_row, dim, hidden = prepared
    return _ffn_forward(
        x, w1_t, b1_row, w2_t, b2_row,
        dim=dim, hidden=hidden, tm=int(tm),
        single_buf=_single_buffering_supported(),
        vmem_cap=_vmem_capacity_bytes())


def _reference(x, w1, b1, w2, b2):
    h = jnp.einsum("bsd,hd->bsh", x, w1) + b1
    h = 0.5 * h * (1.0 + jax.lax.erf(h / jnp.sqrt(2.0)))
    return jnp.einsum("bsh,dh->bsd", h, w2) + b2


if __name__ == "__main__":
    batch, seq, dim, mult = 2, 8, 32, 4
    hidden = dim * mult

    key = jax.random.PRNGKey(0)
    kx, kw1, kb1, kw2, kb2 = jax.random.split(key, 5)

    x = jax.random.normal(kx, (batch, seq, dim), dtype=jnp.float32)
    # Deterministic synthetic parameters (nn.Linear shapes: weight (out, in)).
    w1 = jax.random.normal(kw1, (hidden, dim), dtype=jnp.float32) * 0.05
    b1 = jax.random.normal(kb1, (hidden,), dtype=jnp.float32) * 0.05
    w2 = jax.random.normal(kw2, (dim, hidden), dtype=jnp.float32) * 0.05
    b2 = jax.random.normal(kb2, (dim,), dtype=jnp.float32) * 0.05

    # One-time weight prep (hoisted out of the per-call path), then the kernel.
    prepared = prepare_ffn_params(w1, b1, w2, b2)
    out = feed_forward_active(x, w1, b1, w2, b2, prepared=prepared)
    out = jax.block_until_ready(out)

    ref = _reference(x, w1, b1, w2, b2)
    assert out.shape == (batch, seq, dim)
    assert jnp.allclose(out, ref, atol=1e-4, rtol=1e-4), "mismatch vs reference"

    print("KERNEL_OK")
</pallas_src>

<mosaic_0001>
module attributes {stable_mosaic.version = 11 : i64} {
  func.func @_probe(%arg0: i32, %arg1: memref<8x128xf32, #tpu.memory_space<vmem>>, %arg2: memref<8x128xf32, #tpu.memory_space<vmem>>) attributes {dimension_semantics = [#tpu.dimension_semantics<arbitrary>], iteration_bounds = array<i64: 2>, scalar_prefetch = 0 : i64, scratch_operands = 0 : i64, tpu.core_type = #tpu.core_type<tc>, window_params = [{pipeline_mode = #tpu.pipeline_mode<synchronous>, transform_indices = @transform_0, window_bounds = array<i64: 8, 128>}, {pipeline_mode = #tpu.pipeline_mode<synchronous>, transform_indices = @transform_1, window_bounds = array<i64: 8, 128>}]} {
    %c0 = arith.constant 0 : index
    %c0_0 = arith.constant 0 : index
    %0 = vector.load %arg1[%c0, %c0_0] : memref<8x128xf32, #tpu.memory_space<vmem>>, vector<8x128xf32>
    %cst = arith.constant 1.000000e+00 : f32
    %1 = vector.broadcast %cst : f32 to vector<8x128xf32>
    %2 = arith.addf %0, %1 : vector<8x128xf32>
    %c0_1 = arith.constant 0 : index
    %c0_2 = arith.constant 0 : index
    %3 = vector.load %arg2[%c0_1, %c0_2] : memref<8x128xf32, #tpu.memory_space<vmem>>, vector<8x128xf32>
    tpu.vector_store %arg2[%c0_1, %c0_2], %2 {strides = array<i32>} : memref<8x128xf32, #tpu.memory_space<vmem>>, vector<8x128xf32>,
    return
  }
  func.func @transform_0(%arg0: i32) -> (i32, i32) {
    %c0_i32 = arith.constant 0 : i32
    %c0_i32_0 = arith.constant 0 : i32
    %c0_i32_1 = arith.constant 0 : i32
    return %c0_i32, %c0_i32_0 : i32, i32
  }
  func.func @transform_1(%arg0: i32) -> (i32, i32) {
    %c0_i32 = arith.constant 0 : i32
    %c0_i32_0 = arith.constant 0 : i32
    %c0_i32_1 = arith.constant 0 : i32
    return %c0_i32, %c0_i32_0 : i32, i32
  }
}

module attributes {stable_mosaic.version = 11 : i64} {
  func.func @_ffn_kernel(%arg0: i32, %arg1: i32, %arg2: memref<8x128xf32, #tpu.memory_space<vmem>>, %arg3: memref<128x128xf32, #tpu.memory_space<vmem>>, %arg4: memref<1x128xf32, #tpu.memory_space<vmem>>, %arg5: memref<128x128xf32, #tpu.memory_space<vmem>>, %arg6: memref<1x128xf32, #tpu.memory_space<vmem>>, %arg7: memref<8x128xf32, #tpu.memory_space<vmem>>, %arg8: memref<8x128xf32, #tpu.memory_space<vmem>>) attributes {dimension_semantics = [#tpu.dimension_semantics<parallel>, #tpu.dimension_semantics<arbitrary>], iteration_bounds = array<i64: 2, 1>, scalar_prefetch = 0 : i64, scratch_operands = 1 : i64, tpu.core_type = #tpu.core_type<tc>, window_params = [{transform_indices = @transform_0, window_bounds = array<i64: 8, 128>}, {transform_indices = @transform_1, window_bounds = array<i64: 128, 128>}, {transform_indices = @transform_2, window_bounds = array<i64: 1, 128>}, {transform_indices = @transform_3, window_bounds = array<i64: 128, 128>}, {pipeline_mode = #tpu.pipeline_mode<synchronous>, transform_indices = @transform_4, window_bounds = array<i64: 1, 128>}, {transform_indices = @transform_5, window_bounds = array<i64: 8, 128>}]} {
    %c0_i32 = arith.constant 0 : i32
    %0 = arith.cmpi eq, %arg1, %c0_i32 : i32
    %1 = arith.extui %0 : i1 to i32
    %c0_i32_0 = arith.constant 0 : i32
    %2 = arith.cmpi ne, %1, %c0_i32_0 : i32
    scf.if %2 {
      %cst_18 = arith.constant 0.000000e+00 : f32
      %25 = vector.broadcast %cst_18 : f32 to vector<8x128xf32>
      %c0_19 = arith.constant 0 : index
      %c0_20 = arith.constant 0 : index
      %26 = vector.load %arg8[%c0_19, %c0_20] : memref<8x128xf32, #tpu.memory_space<vmem>>, vector<8x128xf32>
      tpu.vector_store %arg8[%c0_19, %c0_20], %25 {strides = array<i32>} : memref<8x128xf32, #tpu.memory_space<vmem>>, vector<8x128xf32>,
    } else {
    }
    %c0 = arith.constant 0 : index
    %c0_1 = arith.constant 0 : index
    %3 = vector.load %arg2[%c0, %c0_1] : memref<8x128xf32, #tpu.memory_space<vmem>>, vector<8x128xf32>
    %c0_2 = arith.constant 0 : index
    %c0_3 = arith.constant 0 : index
    %4 = vector.load %arg3[%c0_2, %c0_3] : memref<128x128xf32, #tpu.memory_space<vmem>>, vector<128x128xf32>
    %cst = arith.constant dense<0.000000e+00> : vector<8x128xf32>
    %5 = tpu.matmul %3, %4, %cst {dimension_numbers = #tpu.dot_dimension_numbers<[1], [0], [0], [1], [0, 0, 1, 1], [], []>} : vector<8x128xf32>, vector<128x128xf32>, vector<8x128xf32> -> vector<8x128xf32>
    %c0_4 = arith.constant 0 : index
    %c0_5 = arith.constant 0 : index
    %6 = vector.load %arg4[%c0_4, %c0_5] : memref<1x128xf32, #tpu.memory_space<vmem>>, vector<1x128xf32>
    %7 = vector.broadcast %6 : vector<1x128xf32> to vector<8x128xf32>
    %8 = arith.addf %5, %7 : vector<8x128xf32>
    %cst_6 = arith.constant 5.000000e-01 : f32
    %9 = vector.broadcast %cst_6 : f32 to vector<8x128xf32>
    %10 = arith.mulf %9, %8 : vector<8x128xf32>
    %cst_7 = arith.constant 0.707106769 : f32
    %11 = vector.broadcast %cst_7 : f32 to vector<8x128xf32>
    %12 = arith.mulf %8, %11 : vector<8x128xf32>
    %13 = math.erf %12 : vector<8x128xf32>
    %cst_8 = arith.constant 1.000000e+00 : f32
    %14 = vector.broadcast %cst_8 : f32 to vector<8x128xf32>
    %15 = arith.addf %14, %13 : vector<8x128xf32>
    %16 = arith.mulf %10, %15 : vector<8x128xf32>
    %c0_9 = arith.constant 0 : index
    %c0_10 = arith.constant 0 : index
    %17 = vector.load %arg8[%c0_9, %c0_10] : memref<8x128xf32, #tpu.memory_space<vmem>>, vector<8x128xf32>
    %c0_11 = arith.constant 0 : index
    %c0_12 = arith.constant 0 : index
    %18 = vector.load %arg5[%c0_11, %c0_12] : memref<128x128xf32, #tpu.memory_space<vmem>>, vector<128x128xf32>
    %cst_13 = arith.constant dense<0.000000e+00> : vector<8x128xf32>
    %19 = tpu.matmul %16, %18, %cst_13 {dimension_numbers = #tpu.dot_dimension_numbers<[1], [0], [0], [1], [0, 0, 1, 1], [], []>} : vector<8x128xf32>, vector<128x128xf32>, vector<8x128xf32> -> vector<8x128xf32>
    %20 = arith.addf %17, %19 : vector<8x128xf32>
    %c0_14 = arith.constant 0 : index
    %c0_15 = arith.constant 0 : index
    %21 = vector.load %arg8[%c0_14, %c0_15] : memref<8x128xf32, #tpu.memory_space<vmem>>, vector<8x128xf32>
    tpu.vector_store %arg8[%c0_14, %c0_15], %20 {strides = array<i32>} : memref<8x128xf32, #tpu.memory_space<vmem>>, vector<8x128xf32>,
    %c0_i32_16 = arith.constant 0 : i32
    %22 = arith.cmpi eq, %arg1, %c0_i32_16 : i32
    %23 = arith.extui %22 : i1 to i32
    %c0_i32_17 = arith.constant 0 : i32
    %24 = arith.cmpi ne, %23, %c0_i32_17 : i32
    scf.if %24 {
      %c0_18 = arith.constant 0 : index
      %c0_19 = arith.constant 0 : index
      %25 = vector.load %arg8[%c0_18, %c0_19] : memref<8x128xf32, #tpu.memory_space<vmem>>, vector<8x128xf32>
      %c0_20 = arith.constant 0 : index
      %c0_21 = arith.constant 0 : index
      %26 = vector.load %arg6[%c0_20, %c0_21] : memref<1x128xf32, #tpu.memory_space<vmem>>, vector<1x128xf32>
      %27 = vector.broadcast %26 : vector<1x128xf32> to vector<8x128xf32>
      %28 = arith.addf %25, %27 : vector<8x128xf32>
      %c0_22 = arith.constant 0 : index
      %c0_23 = arith.constant 0 : index
      %29 = vector.load %arg7[%c0_22, %c0_23] : memref<8x128xf32, #tpu.memory_space<vmem>>, vector<8x128xf32>
      tpu.vector_store %arg7[%c0_22, %c0_23], %28 {strides = array<i32>} : memref<8x128xf32, #tpu.memory_space<vmem>>, vector<8x128xf32>,
    } else {
    }
    return
  }
  func.func @transform_0(%arg0: i32, %arg1: i32) -> (i32, i32) {
    %c0_i32 = arith.constant 0 : i32
    %c0_i32_0 = arith.constant 0 : i32
    return %arg0, %c0_i32 : i32, i32
  }
  func.func @transform_1(%arg0: i32, %arg1: i32) -> (i32, i32) {
    %c0_i32 = arith.constant 0 : i32
    %c0_i32_0 = arith.constant 0 : i32
    return %c0_i32, %arg1 : i32, i32
  }
  func.func @transform_2(%arg0: i32, %arg1: i32) -> (i32, i32) {
    %c0_i32 = arith.constant 0 : i32
    %c0_i32_0 = arith.constant 0 : i32
    return %c0_i32, %arg1 : i32, i32
  }
  func.func @transform_3(%arg0: i32, %arg1: i32) -> (i32, i32) {
    %c0_i32 = arith.constant 0 : i32
    %c0_i32_0 = arith.constant 0 : i32
    return %arg1, %c0_i32 : i32, i32
  }
  func.func @transform_4(%arg0: i32, %arg1: i32) -> (i32, i32) {
    %c0_i32 = arith.constant 0 : i32
    %c0_i32_0 = arith.constant 0 : i32
    %c0_i32_1 = arith.constant 0 : i32
    return %c0_i32, %c0_i32_0 : i32, i32
  }
  func.func @transform_5(%arg0: i32, %arg1: i32) -> (i32, i32) {
    %c0_i32 = arith.constant 0 : i32
    %c0_i32_0 = arith.constant 0 : i32
    return %arg0, %c0_i32 : i32, i32
  }
}

</mosaic_0001>

<llo_original>
// kernel: tpu_custom_call.1
$region0: #{tpu_custom_call.1}
  #allocation0 [shape = 'u32[]', space=smem, size = 0x4, offset = 0x4, fixed_abs, tag = 'smem constant byte address 0x4 - core index']
  #allocation1 [shape = 'u32[72,128]{1,0:T(1,128)}', space=vmem, size = 0x9000, scoped, tag = 'internal scratch']
  %s0 = inlined_call_operand.hbm [shape: f32[8,128], index: 0, kind: input, shape index: {}]
  %s1 = inlined_call_operand.hbm [shape: f32[8,128], index: 1, kind: output, shape index: {}]
  %s2 = sld [smem:[#allocation0]]
  $region41: #{tpu_custom_call.1} parent=0
    _
  %s4 = ssub.s32 1, %s2
  %s5 = scalar_select 0, %s4, %s2
  $region1: #{tpu_custom_call.1} parent=0
    #allocation2 [shape = 'u8[4096]{0}', space=vmem, size = 0x1000, scoped, tag = 'input window, operand 0, single buffered']
    #allocation3 [shape = 's32[2]{0}', space=sflag, size = 0x8, scoped, tag = 'scoped memory for tpu_custom_call.1']
    #allocation4 [shape = 's32[2]{0}', space=sflag, size = 0x8, scoped, tag = 'scoped memory for tpu_custom_call.1']
    #allocation5 [shape = 'u8[4096]{0}', space=vmem, size = 0x1000, scoped, tag = 'output window, operand 0, single buffered']
    %6 = vsyncpa [#allocation3], 0
    %7 = vsyncpa [#allocation4], 0
    loop: start=0, step=1, limit=4
    $region2: #{tpu_custom_call.1} parent=1 // loop_pre_header
      _
    $region3: #{tpu_custom_call.1} parent=1 // loop_header
      %s9 = sphi 0, %s13
      %p10 = scmp.ge.s32.totalorder %s9, 4
      %s17 = sphi 0, %s17
      %s19 = sphi 0, %s17
      %s20 = sphi 0, %s19
      %s34 = sphi 0, %s20
      %s38 = sphi 0, %s38
      %s40 = sphi 0, %s38
      %s41 = sphi 0, %s40
      %s55 = sphi 0, %s41
    $region4: #{tpu_custom_call.1} parent=1 // loop_header_branch
      %12 = sbr.rel (%p10) target = $region8
    $region5: #{tpu_custom_call.1} parent=1 // loop_body
      %s14 = ssub.s32 %s9, 1
      %s15 = ssub.s32 %s9, 2
      %s16 = sadd.s32 %s9, 1
      %s18 = sadd.s32 %s17, 1
      %p21 = scmp.eq.s32.totalorder %s9, 1
      %p22 = scmp.ne.s32.totalorder %s17, %s19
      %p23 = scmp.eq.s32.totalorder %s9, 0
      %p24 = por %p22, %p23
      %p25 = scmp.ne.s32.totalorder %s17, %s19
      %p26 = scmp.eq.s32.totalorder %s14, 1
      %p27 = por %p25, %p26
      %p28 = scmp.ne.s32.totalorder %s19, %s20
      %p29 = scmp.eq.s32.totalorder %s14, 0
      %p30 = por %p28, %p29
      %p31 = scmp.ne.s32.totalorder %s19, %s20
      %p32 = scmp.eq.s32.totalorder %s15, 1
      %p33 = por %p31, %p32
      %p35 = scmp.ne.s32.totalorder %s20, %s34
      %p36 = scmp.eq.s32.totalorder %s15, 0
      %p37 = por %p35, %p36
      %s39 = sadd.s32 %s38, 1
      %p42 = scmp.eq.s32.totalorder %s9, 1
      %p43 = scmp.ne.s32.totalorder %s38, %s40
      %p44 = scmp.eq.s32.totalorder %s9, 0
      %p45 = por %p43, %p44
      %p46 = scmp.ne.s32.totalorder %s38, %s40
      %p47 = scmp.eq.s32.totalorder %s14, 1
      %p48 = por %p46, %p47
      %p49 = scmp.ne.s32.totalorder %s40, %s41
      %p50 = scmp.eq.s32.totalorder %s14, 0
      %p51 = por %p49, %p50
      %p52 = scmp.ne.s32.totalorder %s40, %s41
      %p53 = scmp.eq.s32.totalorder %s15, 1
      %p54 = por %p52, %p53
      %p56 = scmp.ne.s32.totalorder %s41, %s55
      %p57 = scmp.eq.s32.totalorder %s15, 0
      %p58 = por %p56, %p57
      %p59 = scmp.le.s32.totalorder 1, %s9
      %p60 = scmp.lt.s32.totalorder %s9, 3
      %p61 = pnand %p59, %p60
      %p62 = pneg %p61
      // Predicated region
      $region9: #{tpu_custom_call.1} parent=5 // pred_check
        _
      $region10: #{tpu_custom_call.1} parent=5 // pred_check_branch
        %64 = sbr.rel (%p61) target = $region12
      $region11: #{tpu_custom_call.1} parent=5 // pred_region
        %s65 = ssub.s32 %s9, 1
        // Predicated region
        $region13: #{tpu_custom_call.1} parent=11 // pred_check
          %p66 = pneg %p30
        $region14: #{tpu_custom_call.1} parent=11 // pred_check_branch
          %68 = sbr.rel (%p66) target = $region16
        $region15: #{tpu_custom_call.1} parent=11 // pred_region
          %70 = vsyncadd [#allocation3], 0
          %s72 = sshll.u32 %s0, 4
          %s73 = int_to_ptr.hbm [resolvable:$true] %s72
          %s74 = sshll.u32 [#allocation2], 4
          %s75 = int_to_ptr.vmem [resolvable:$true] %s74
          %77 = dma.hbm_to_vmem [thread:$0]  %s73, 128, %s75, [#allocation3]
        $region16: #{tpu_custom_call.1} parent=11 // pred_fallthru
          _
      $region12: #{tpu_custom_call.1} parent=5 // pred_fallthru
        _
      %p78 = scmp.lt.s32.totalorder %s9, 2
      // Predicated region
      $region17: #{tpu_custom_call.1} parent=5 // pred_check
        %p79 = pneg %p78
      $region18: #{tpu_custom_call.1} parent=5 // pred_check_branch
        %81 = sbr.rel (%p79) target = $region20
      $region19: #{tpu_custom_call.1} parent=5 // pred_region
        _
      $region20: #{tpu_custom_call.1} parent=5 // pred_fallthru
        _
      %p82 = scmp.le.s32.totalorder 1, %s9
      %p83 = scmp.lt.s32.totalorder %s9, 3
      %p84 = pnand %p82, %p83
      %p85 = pneg %p84
      // Predicated region
      $region21: #{tpu_custom_call.1} parent=5 // pred_check
        _
      $region22: #{tpu_custom_call.1} parent=5 // pred_check_branch
        %87 = sbr.rel (%p84) target = $region24
      $region23: #{tpu_custom_call.1} parent=5 // pred_region
        %s88 = ssub.s32 %s9, 1
        // Predicated region
        $region25: #{tpu_custom_call.1} parent=23 // pred_check
          %p89 = pneg %p30
        $region26: #{tpu_custom_call.1} parent=23 // pred_check_branch
          %91 = sbr.rel (%p89) target = $region28
        $region27: #{tpu_custom_call.1} parent=23 // pred_region
          %93 = dma.done [#allocation3], 128
        $region28: #{tpu_custom_call.1} parent=23 // pred_fallthru
          _
        %p94 = pneg %p30
        %p95 = pneg %p27
        %p96 = pneg %p51
        %p97 = pneg %p48
        %v98 = vld [vmem:[#allocation2] sm:$0xff]
        %v99 = vadd.f32 %v98, 1.0
        %100 = vst [vmem:[#allocation5] sm:$0xff] %v99
        // Predicated region
        $region29: #{tpu_custom_call.1} parent=23 // pred_check
          %p101 = pneg %p48
        $region30: #{tpu_custom_call.1} parent=23 // pred_check_branch
          %103 = sbr.rel (%p101) target = $region32
        $region31: #{tpu_custom_call.1} parent=23 // pred_region
          %105 = vsyncadd [#allocation4], 0
          %s107 = sshll.u32 [#allocation5], 4
          %s108 = int_to_ptr.vmem [resolvable:$true] %s107
          %s109 = sshll.u32 %s1, 4
          %s110 = int_to_ptr.hbm [resolvable:$true] %s109
          %112 = dma.vmem_to_hbm [thread:$0]  %s108, 128, %s110, [#allocation4]
        $region32: #{tpu_custom_call.1} parent=23 // pred_fallthru
          _
        // Predicated region
        $region33: #{tpu_custom_call.1} parent=23 // pred_check
          %p113 = pneg %p48
        $region34: #{tpu_custom_call.1} parent=23 // pred_check_branch
          %115 = sbr.rel (%p113) target = $region36
        $region35: #{tpu_custom_call.1} parent=23 // pred_region
          %117 = dma.done [#allocation4], 128
        $region36: #{tpu_custom_call.1} parent=23 // pred_fallthru
          _
      $region24: #{tpu_custom_call.1} parent=5 // pred_fallthru
        _
      %p118 = scmp.le.s32.totalorder 2, %s9
      // Predicated region
      $region37: #{tpu_custom_call.1} parent=5 // pred_check
        %p119 = pneg %p118
      $region38: #{tpu_custom_call.1} parent=5 // pred_check_branch
        %121 = sbr.rel (%p119) target = $region40
      $region39: #{tpu_custom_call.1} parent=5 // pred_region
        %s122 = ssub.s32 %s9, 2
      $region40: #{tpu_custom_call.1} parent=5 // pred_fallthru
        _
    $region6: #{tpu_custom_call.1} parent=1 // loop_footer
      %s13 = sadd.s32 1, %s9
    $region7: #{tpu_custom_call.1} parent=1 // loop_footer_branch
      %8 = sbr.rel target = $region3
    $region8: #{tpu_custom_call.1} parent=1 // loop_exit
      _
    %123 = vsyncpa [#allocation3], 1
    %s124 = scalar_lea.sflag [#allocation3], 1
    %125 = vsyncpa %s124, 1
    %126 = vsyncpa [#allocation4], 1
    %s127 = scalar_lea.sflag [#allocation4], 1
    %128 = vsyncpa %s127, 1

// kernel: _ffn_forward.1
$region0: #{_ffn_forward.1}
  #allocation0 [shape = 'u32[]', space=smem, size = 0x4, offset = 0x4, fixed_abs, tag = 'smem constant byte address 0x4 - core index']
  #allocation1 [shape = 'u32[72,128]{1,0:T(1,128)}', space=vmem, size = 0x9000, scoped, tag = 'internal scratch']
  #allocation2 [shape = 'f32[8,128]{1,0:T(8,128)}', space=vmem, size = 0x1000, scoped, tag = 'scratch operand']
  %s0 = inlined_call_operand.vmem [shape: f32[16,128], index: 0, kind: input, shape index: {}]
  %s1 = inlined_call_operand.hbm [shape: f32[128,128], index: 1, kind: input, shape index: {}]
  %s2 = inlined_call_operand.vmem [shape: f32[1,128], index: 2, kind: input, shape index: {}]
  %s3 = inlined_call_operand.hbm [shape: f32[128,128], index: 3, kind: input, shape index: {}]
  %s4 = inlined_call_operand.vmem [shape: f32[1,128], index: 4, kind: input, shape index: {}]
  %s5 = inlined_call_operand.vmem [shape: f32[16,128], index: 5, kind: output, shape index: {}]
  %s6 = sld [smem:[#allocation0]]
  $region69: #{_ffn_forward.1} parent=0
    _
  %s8 = ssub.s32 1, %s6
  %s9 = scalar_select 0, %s8, %s6
  $region1: #{_ffn_forward.1} parent=0
    #allocation3 [shape = 'u8[65536]{0}', space=vmem, size = 0x10000, scoped, tag = 'input window, operand 1, single buffered']
    #allocation4 [shape = 's32[2]{0}', space=sflag, size = 0x8, scoped, tag = 'scoped memory for _ffn_forward.1']
    #allocation5 [shape = 'u8[65536]{0}', space=vmem, size = 0x10000, scoped, tag = 'input window, operand 3, single buffered']
    #allocation6 [shape = 's32[1]{0}', space=sflag, size = 0x4, scoped, tag = 'scoped memory for _ffn_forward.1']
    %10 = vsyncpa [#allocation4], 0
    %11 = vsyncpa [#allocation6], 0
    loop: start=0, step=1, limit=4
    $region2: #{_ffn_forward.1} parent=1 // loop_pre_header
      _
    $region3: #{_ffn_forward.1} parent=1 // loop_header
      %s13 = sphi 0, %s17
      %p14 = scmp.ge.s32.totalorder %s13, 4
      %s20 = sphi 0, %s32
      %s21 = sphi 0, %s28
      %s22 = sphi 0, %s20
      %s23 = sphi 0, %s21
      %s24 = sphi 0, %s22
      %s25 = sphi 0, %s23
      %s35 = sphi 0, %s37
      %s38 = sphi 0, %s35
      %s39 = sphi 0, %s38
      %s55 = sphi 0, %s39
      %s61 = sphi 0, %s63
      %s64 = sphi 0, %s61
      %s65 = sphi 0, %s64
      %s81 = sphi 0, %s65
      %s87 = sphi 0, %s89
      %s90 = sphi 0, %s87
      %s91 = sphi 0, %s90
      %s107 = sphi 0, %s91
      %s113 = sphi 0, %s115
      %s116 = sphi 0, %s113
      %s117 = sphi 0, %s116
      %s133 = sphi 0, %s117
      %s137 = sphi 0, %s137
      %s139 = sphi 0, %s137
      %s140 = sphi 0, %s139
      %s154 = sphi 0, %s140
      %s160 = sphi 0, %s162
      %s163 = sphi 0, %s160
      %s164 = sphi 0, %s163
      %s180 = sphi 0, %s164
    $region4: #{_ffn_forward.1} parent=1 // loop_header_branch
      %16 = sbr.rel (%p14) target = $region8
    $region5: #{_ffn_forward.1} parent=1 // loop_body
      %s18 = ssub.s32 %s13, 1
      %s19 = ssub.s32 %s13, 2
      %s26 = sadd.s32 1, %s21
      %p27 = scmp.ge.s32.totalorder %s26, 1
      %s28 = scalar_select %p27, 0, %s26
      %s29 = sadd.s32 1, %s20
      %s30 = scalar_select %p27, %s29, %s20
      %p31 = scmp.ge.s32.totalorder %s30, 2
      %s32 = scalar_select %p31, 0, %s30
      %s33 = ssub.s32 %s20, %s32
      %p34 = scmp.eq.s32.totalorder %s33, 0
      %s36 = sadd.s32 %s35, 1
      %s37 = scalar_select %p34, %s35, %s36
      %p40 = pneg %p34
      %p41 = scmp.eq.s32.totalorder %s13, 1
      %p42 = por %p40, %p41
      %p43 = scmp.ne.s32.totalorder %s35, %s38
      %p44 = scmp.eq.s32.totalorder %s13, 0
      %p45 = por %p43, %p44
      %p46 = scmp.ne.s32.totalorder %s35, %s38
      %p47 = scmp.eq.s32.totalorder %s18, 1
      %p48 = por %p46, %p47
      %p49 = scmp.ne.s32.totalorder %s38, %s39
      %p50 = scmp.eq.s32.totalorder %s18, 0
      %p51 = por %p49, %p50
      %p52 = scmp.ne.s32.totalorder %s38, %s39
      %p53 = scmp.eq.s32.totalorder %s19, 1
      %p54 = por %p52, %p53
      %p56 = scmp.ne.s32.totalorder %s39, %s55
      %p57 = scmp.eq.s32.totalorder %s19, 0
      %p58 = por %p56, %p57
      %s59 = ssub.s32 %s21, %s28
      %p60 = scmp.eq.s32.totalorder %s59, 0
      %s62 = sadd.s32 %s61, 1
      %s63 = scalar_select %p60, %s61, %s62
      %p66 = pneg %p60
      %p67 = scmp.eq.s32.totalorder %s13, 1
      %p68 = por %p66, %p67
      %p69 = scmp.ne.s32.totalorder %s61, %s64
      %p70 = scmp.eq.s32.totalorder %s13, 0
      %p71 = por %p69, %p70
      %p72 = scmp.ne.s32.totalorder %s61, %s64
      %p73 = scmp.eq.s32.totalorder %s18, 1
      %p74 = por %p72, %p73
      %p75 = scmp.ne.s32.totalorder %s64, %s65
      %p76 = scmp.eq.s32.totalorder %s18, 0
      %p77 = por %p75, %p76
      %p78 = scmp.ne.s32.totalorder %s64, %s65
      %p79 = scmp.eq.s32.totalorder %s19, 1
      %p80 = por %p78, %p79
      %p82 = scmp.ne.s32.totalorder %s65, %s81
      %p83 = scmp.eq.s32.totalorder %s19, 0
      %p84 = por %p82, %p83
      %s85 = ssub.s32 %s21, %s28
      %p86 = scmp.eq.s32.totalorder %s85, 0
      %s88 = sadd.s32 %s87, 1
      %s89 = scalar_select %p86, %s87, %s88
      %p92 = pneg %p86
      %p93 = scmp.eq.s32.totalorder %s13, 1
      %p94 = por %p92, %p93
      %p95 = scmp.ne.s32.totalorder %s87, %s90
      %p96 = scmp.eq.s32.totalorder %s13, 0
      %p97 = por %p95, %p96
      %p98 = scmp.ne.s32.totalorder %s87, %s90
      %p99 = scmp.eq.s32.totalorder %s18, 1
      %p100 = por %p98, %p99
      %p101 = scmp.ne.s32.totalorder %s90, %s91
      %p102 = scmp.eq.s32.totalorder %s18, 0
      %p103 = por %p101, %p102
      %p104 = scmp.ne.s32.totalorder %s90, %s91
      %p105 = scmp.eq.s32.totalorder %s19, 1
      %p106 = por %p104, %p105
      %p108 = scmp.ne.s32.totalorder %s91, %s107
      %p109 = scmp.eq.s32.totalorder %s19, 0
      %p110 = por %p108, %p109
      %s111 = ssub.s32 %s21, %s28
      %p112 = scmp.eq.s32.totalorder %s111, 0
      %s114 = sadd.s32 %s113, 1
      %s115 = scalar_select %p112, %s113, %s114
      %p118 = pneg %p112
      %p119 = scmp.eq.s32.totalorder %s13, 1
      %p120 = por %p118, %p119
      %p121 = scmp.ne.s32.totalorder %s113, %s116
      %p122 = scmp.eq.s32.totalorder %s13, 0
      %p123 = por %p121, %p122
      %p124 = scmp.ne.s32.totalorder %s113, %s116
      %p125 = scmp.eq.s32.totalorder %s18, 1
      %p126 = por %p124, %p125
      %p127 = scmp.ne.s32.totalorder %s116, %s117
      %p128 = scmp.eq.s32.totalorder %s18, 0
      %p129 = por %p127, %p128
      %p130 = scmp.ne.s32.totalorder %s116, %s117
      %p131 = scmp.eq.s32.totalorder %s19, 1
      %p132 = por %p130, %p131
      %p134 = scmp.ne.s32.totalorder %s117, %s133
      %p135 = scmp.eq.s32.totalorder %s19, 0
      %p136 = por %p134, %p135
      %s138 = sadd.s32 %s137, 1
      %p141 = scmp.eq.s32.totalorder %s13, 1
      %p142 = scmp.ne.s32.totalorder %s137, %s139
      %p143 = scmp.eq.s32.totalorder %s13, 0
      %p144 = por %p142, %p143
      %p145 = scmp.ne.s32.totalorder %s137, %s139
      %p146 = scmp.eq.s32.totalorder %s18, 1
      %p147 = por %p145, %p146
      %p148 = scmp.ne.s32.totalorder %s139, %s140
      %p149 = scmp.eq.s32.totalorder %s18, 0
      %p150 = por %p148, %p149
      %p151 = scmp.ne.s32.totalorder %s139, %s140
      %p152 = scmp.eq.s32.totalorder %s19, 1
      %p153 = por %p151, %p152
      %p155 = scmp.ne.s32.totalorder %s140, %s154
      %p156 = scmp.eq.s32.totalorder %s19, 0
      %p157 = por %p155, %p156
      %s158 = ssub.s32 %s20, %s32
      %p159 = scmp.eq.s32.totalorder %s158, 0
      %s161 = sadd.s32 %s160, 1
      %s162 = scalar_select %p159, %s160, %s161
      %p165 = pneg %p159
      %p166 = scmp.eq.s32.totalorder %s13, 1
      %p167 = por %p165, %p166
      %p168 = scmp.ne.s32.totalorder %s160, %s163
      %p169 = scmp.eq.s32.totalorder %s13, 0
      %p170 = por %p168, %p169
      %p171 = scmp.ne.s32.totalorder %s160, %s163
      %p172 = scmp.eq.s32.totalorder %s18, 1
      %p173 = por %p171, %p172
      %p174 = scmp.ne.s32.totalorder %s163, %s164
      %p175 = scmp.eq.s32.totalorder %s18, 0
      %p176 = por %p174, %p175
      %p177 = scmp.ne.s32.totalorder %s163, %s164
      %p178 = scmp.eq.s32.totalorder %s19, 1
      %p179 = por %p177, %p178
      %p181 = scmp.ne.s32.totalorder %s164, %s180
      %p182 = scmp.eq.s32.totalorder %s19, 0
      %p183 = por %p181, %p182
      %p184 = scmp.le.s32.totalorder 1, %s13
      %p185 = scmp.lt.s32.totalorder %s13, 3
      %p186 = pnand %p184, %p185
      %p187 = pneg %p186
      // Predicated region
      $region9: #{_ffn_forward.1} parent=5 // pred_check
        _
      $region10: #{_ffn_forward.1} parent=5 // pred_check_branch
        %189 = sbr.rel (%p186) target = $region12
      $region11: #{_ffn_forward.1} parent=5 // pred_region
        %s190 = ssub.s32 %s13, 1
        // Predicated region
        $region13: #{_ffn_forward.1} parent=11 // pred_check
          %p191 = pneg %p77
        $region14: #{_ffn_forward.1} parent=11 // pred_check_branch
          %193 = sbr.rel (%p191) target = $region16
        $region15: #{_ffn_forward.1} parent=11 // pred_region
          %195 = vsyncadd [#allocation4], 0
          %s196 = smul.addr %s23, 8
          %s197 = scalar_lea.hbm %s1, %s196
          %s198 = sshll.u32 %s197, 4
          %s199 = int_to_ptr.hbm [resolvable:$true] %s198
          %s200 = sshll.u32 [#allocation3], 4
          %s201 = int_to_ptr.vmem [resolvable:$true] %s200
          %206 = dma.hbm_to_vmem [thread:$0]  %s199, 2048, %s201, [#allocation4], 128, 128, 8
        $region16: #{_ffn_forward.1} parent=11 // pred_fallthru
          _
        // Predicated region
        $region17: #{_ffn_forward.1} parent=11 // pred_check
          %p207 = pneg %p103
        $region18: #{_ffn_forward.1} parent=11 // pred_check_branch
          %209 = sbr.rel (%p207) target = $region20
        $region19: #{_ffn_forward.1} parent=11 // pred_region
          %p210 = scmp.lt.s32.totalorder %s23, 0
          %s211 = scalar_select %p210, %s23, 0
          %s212 = scalar_lea.vmem %s2, %s211
        $region20: #{_ffn_forward.1} parent=11 // pred_fallthru
          _
        // Predicated region
        $region21: #{_ffn_forward.1} parent=11 // pred_check
          %p213 = pneg %p129
        $region22: #{_ffn_forward.1} parent=11 // pred_check_branch
          %215 = sbr.rel (%p213) target = $region24
        $region23: #{_ffn_forward.1} parent=11 // pred_region
          %s216 = smul.u32 16, %s23
          %218 = vsyncadd [#allocation6], 0
          %s219 = smul.addr %s216, 8
          %s220 = scalar_lea.hbm %s3, %s219
          %s221 = sshll.u32 %s220, 4
          %s222 = int_to_ptr.hbm [resolvable:$true] %s221
          %s223 = sshll.u32 [#allocation5], 4
          %s224 = int_to_ptr.vmem [resolvable:$true] %s223
          %229 = dma.hbm_to_vmem [thread:$0]  %s222, 2048, %s224, [#allocation6], 128, 128, 8
        $region24: #{_ffn_forward.1} parent=11 // pred_fallthru
          _
        // Predicated region
        $region25: #{_ffn_forward.1} parent=11 // pred_check
          %p230 = pneg %p150
        $region26: #{_ffn_forward.1} parent=11 // pred_check_branch
          %232 = sbr.rel (%p230) target = $region28
        $region27: #{_ffn_forward.1} parent=11 // pred_region
          _
        $region28: #{_ffn_forward.1} parent=11 // pred_fallthru
          _
      $region12: #{_ffn_forward.1} parent=5 // pred_fallthru
        _
      %p233 = scmp.lt.s32.totalorder %s13, 2
      // Predicated region
      $region29: #{_ffn_forward.1} parent=5 // pred_check
        %p234 = pneg %p233
      $region30: #{_ffn_forward.1} parent=5 // pred_check_branch
        %236 = sbr.rel (%p234) target = $region32
      $region31: #{_ffn_forward.1} parent=5 // pred_region
        // Predicated region
        $region33: #{_ffn_forward.1} parent=31 // pred_check
          %p237 = pneg %p45
        $region34: #{_ffn_forward.1} parent=31 // pred_check_branch
          %239 = sbr.rel (%p237) target = $region36
        $region35: #{_ffn_forward.1} parent=31 // pred_region
          %p240 = scmp.lt.s32.totalorder %s20, 1
          %s241 = scalar_select %p240, %s20, 1
          %s242 = smul.addr %s241, 8
          %s243 = scalar_lea.vmem %s0, %s242
        $region36: #{_ffn_forward.1} parent=31 // pred_fallthru
          _
      $region32: #{_ffn_forward.1} parent=5 // pred_fallthru
        _
      %p244 = scmp.le.s32.totalorder 1, %s13
      %p245 = scmp.lt.s32.totalorder %s13, 3
      %p246 = pnand %p244, %p245
      %p247 = pneg %p246
      // Predicated region
      $region37: #{_ffn_forward.1} parent=5 // pred_check
        _
      $region38: #{_ffn_forward.1} parent=5 // pred_check_branch
        %249 = sbr.rel (%p246) target = $region40
      $region39: #{_ffn_forward.1} parent=5 // pred_region
        %s250 = ssub.s32 %s13, 1
        // Predicated region
        $region41: #{_ffn_forward.1} parent=39 // pred_check
          %p251 = pneg %p77
        $region42: #{_ffn_forward.1} parent=39 // pred_check_branch
          %253 = sbr.rel (%p251) target = $region44
        $region43: #{_ffn_forward.1} parent=39 // pred_region
          %255 = dma.done [#allocation4], 2048
        $region44: #{_ffn_forward.1} parent=39 // pred_fallthru
          _
        // Predicated region
        $region45: #{_ffn_forward.1} parent=39 // pred_check
          %p256 = pneg %p129
        $region46: #{_ffn_forward.1} parent=39 // pred_check_branch
          %258 = sbr.rel (%p256) target = $region48
        $region47: #{_ffn_forward.1} parent=39 // pred_region
          %260 = dma.done [#allocation6], 2048
        $region48: #{_ffn_forward.1} parent=39 // pred_fallthru
          _
        %p261 = scmp.lt.s32.totalorder %s22, 1
        %s262 = scalar_select %p261, %s22, 1
        %s263 = smul.addr %s262, 8
        %s264 = scalar_lea.vmem %s0, %s263
        %p265 = pneg %p51
        %p266 = pneg %p48
        %p267 = pneg %p77
        %p268 = pneg %p74
        %p269 = scmp.lt.s32.totalorder %s23, 0
        %s270 = scalar_select %p269, %s23, 0
        %s271 = scalar_lea.vmem %s2, %s270
        %p272 = pneg %p103
        %p273 = pneg %p100
        %p274 = pneg %p129
        %p275 = pneg %p126
        %p276 = pneg %p150
        %p277 = pneg %p147
        %p278 = pneg %p176
        %p279 = pneg %p173
        %p280 = scmp.lt.s32.totalorder %s22, 1
        %s281 = scalar_select %p280, %s22, 1
        %s282 = smul.addr %s281, 8
        %s283 = scalar_lea.vmem %s5, %s282
        %p284 = scmp.lt.s32.totalorder %s22, 1
        %s285 = scalar_select %p284, %s22, 1
        %s286 = smul.addr %s285, 8
        %s287 = scalar_lea.vmem %s0, %s286
        %p288 = scmp.lt.s32.totalorder %s23, 0
        %s289 = scalar_select %p288, %s23, 0
        %s290 = scalar_lea.vmem %s2, %s289
        %s291 = smul.u32 16, %s23
        %p292 = scmp.lt.s32.totalorder %s22, 1
        %s293 = scalar_select %p292, %s22, 1
        %s294 = smul.addr %s293, 8
        %s295 = scalar_lea.vmem %s5, %s294
        %p296 = scmp.eq.s32.totalorder %s23, 0
        // Predicated region
        $region49: #{_ffn_forward.1} parent=39 // pred_check
          %p297 = pneg %p296
        $region50: #{_ffn_forward.1} parent=39 // pred_check_branch
          %299 = sbr.rel (%p297) target = $region52
        $region51: #{_ffn_forward.1} parent=39 // pred_region
          %300 = vst [vmem:[#allocation2] sm:$0xff] 0.0
        $region52: #{_ffn_forward.1} parent=39 // pred_fallthru
          _
        %v301 = vld [vmem:[%s287] sm:$0xff]
        %v302 = vld [vmem:[#allocation3] sm:$0xff]
        %v303 = vld [vmem:[#allocation3 + $0x8] sm:$0xff]
        %v304 = vld [vmem:[#allocation3 + $0x10] sm:$0xff]
        %v305 = vld [vmem:[#allocation3 + $0x18] sm:$0xff]
        %v306 = vld [vmem:[#allocation3 + $0x20] sm:$0xff]
        %v307 = vld [vmem:[#allocation3 + $0x28] sm:$0xff]
        %v308 = vld [vmem:[#allocation3 + $0x30] sm:$0xff]
        %v309 = vld [vmem:[#allocation3 + $0x38] sm:$0xff]
        %v310 = vld [vmem:[#allocation3 + $0x40] sm:$0xff]
        %v311 = vld [vmem:[#allocation3 + $0x48] sm:$0xff]
        %v312 = vld [vmem:[#allocation3 + $0x50] sm:$0xff]
        %v313 = vld [vmem:[#allocation3 + $0x58] sm:$0xff]
        %v314 = vld [vmem:[#allocation3 + $0x60] sm:$0xff]
        %v315 = vld [vmem:[#allocation3 + $0x68] sm:$0xff]
        %v316 = vld [vmem:[#allocation3 + $0x70] sm:$0xff]
        %v317 = vld [vmem:[#allocation3 + $0x78] sm:$0xff]
        %v318 = vld [vmem:[%s290] sm:$0x1]
        %v320 = vperm.slane %v318, 0
        %322 = vmatpush.msra.mxu0 %v317
        %323 = vmatpush.msra.mxu0 %v316
        %324 = vmatpush.msra.mxu0 %v315
        %325 = vmatpush.msra.mxu0 %v314
        %326 = vmatpush.msra.mxu0 %v313
        %327 = vmatpush.msra.mxu0 %v312
        %328 = vmatpush.msra.mxu0 %v311
        %329 = vmatpush.msra.mxu0 %v310
        %330 = vmatpush.msra.mxu0 %v309
        %331 = vmatpush.msra.mxu0 %v308
        %332 = vmatpush.msra.mxu0 %v307
        %333 = vmatpush.msra.mxu0 %v306
        %334 = vmatpush.msra.mxu0 %v305
        %335 = vmatpush.msra.mxu0 %v304
        %336 = vmatpush.msra.mxu0 %v303
        %337 = vmatpush.msra.mxu0 %v302
        %338 = vmatmul.f32.gmra.mxu0 %v301
        %v339 = vpop.f32.mrf.mxu0
        %v340 = vadd.f32 %v320, %v339
        %341 = vdwg.mxu0
        %v342 = vmul.f32 %v340, 0.5
        %v343 = vmul.f32 %v340, 0.70710677
        %v344 = vmul.f32 %v343, %v343
        %v345 = vmin.f32 16.0, %v344
        %v346 = vmul.f32 %v345, 2.1237322e-06
        %v347 = vadd.f32 %v346, 0.00028619796
        %v348 = vmul.f32 %v345, %v347
        %v349 = vadd.f32 %v348, 0.0036580483
        %v350 = vmul.f32 %v345, %v349
        %v351 = vadd.f32 %v350, 0.05243302
        %v352 = vmul.f32 %v345, %v351
        %v353 = vadd.f32 %v352, 0.18741608
        %v354 = vmul.f32 %v345, %v353
        %v355 = vadd.f32 %v354, 1.1283791
        %v356 = vmul.f32 %v343, %v355
        %v357 = vmul.f32 %v345, 3.8918573e-05
        %v358 = vadd.f32 %v357, 0.001143296
        %v359 = vmul.f32 %v345, %v358
        %v360 = vadd.f32 %v359, 0.014752088
        %v361 = vmul.f32 %v345, %v360
        %v362 = vadd.f32 %v361, 0.112945676
        %v363 = vmul.f32 %v345, %v362
        %v364 = vadd.f32 %v363, 0.4994258
        %v365 = vmul.f32 %v345, %v364
        %v366 = vadd.f32 %v365, 1.0
        %v367 = vrcp.pop %v366
        %v368 = vmul.f32 %v366, %v367
        %v369 = vsub.f32 1.0, %v368
        %v370 = vmul.f32 %v367, %v369
        %v371 = vadd.f32 %v367, %v370
        %vm372 = vweird.f32 %v366
        %vm373 = vweird.f32 %v367
        %vm374 = vmor %vm372, %vm373
        %v375 = vsel %vm374, %v367, %v371
        %v376 = vand.u32 2147483647, %v366
        %vm377 = vcmp.eq.f32.partialorder %v376, 8.507059e+37
        %v378 = vand.u32 %v366, 2147483648
        %v379 = vor.u32 1.1754944e-38, %v378
        %v380 = vsel %vm377, %v379, %v375
        %v381 = vmul.f32 %v356, %v380
        %v382 = vmin.f32 %v381, 1.0
        %v383 = vmax.f32 %v382, -1.0
        %v384 = vadd.f32 %v383, 1.0
        %v385 = vmul.f32 %v342, %v384
        %v386 = vld [vmem:[#allocation2] sm:$0xff]
        %v387 = vld [vmem:[#allocation5] sm:$0xff]
        %v388 = vld [vmem:[#allocation5 + $0x8] sm:$0xff]
        %v389 = vld [vmem:[#allocation5 + $0x10] sm:$0xff]
        %v390 = vld [vmem:[#allocation5 + $0x18] sm:$0xff]
        %v391 = vld [vmem:[#allocation5 + $0x20] sm:$0xff]
        %v392 = vld [vmem:[#allocation5 + $0x28] sm:$0xff]
        %v393 = vld [vmem:[#allocation5 + $0x30] sm:$0xff]
        %v394 = vld [vmem:[#allocation5 + $0x38] sm:$0xff]
        %v395 = vld [vmem:[#allocation5 + $0x40] sm:$0xff]
        %v396 = vld [vmem:[#allocation5 + $0x48] sm:$0xff]
        %v397 = vld [vmem:[#allocation5 + $0x50] sm:$0xff]
        %v398 = vld [vmem:[#allocation5 + $0x58] sm:$0xff]
        %v399 = vld [vmem:[#allocation5 + $0x60] sm:$0xff]
        %v400 = vld [vmem:[#allocation5 + $0x68] sm:$0xff]
        %v401 = vld [vmem:[#allocation5 + $0x70] sm:$0xff]
        %v402 = vld [vmem:[#allocation5 + $0x78] sm:$0xff]
        %403 = vmatpush.msra.mxu0 %v402
        %404 = vmatpush.msra.mxu0 %v401
        %405 = vmatpush.msra.mxu0 %v400
        %406 = vmatpush.msra.mxu0 %v399
        %407 = vmatpush.msra.mxu0 %v398
        %408 = vmatpush.msra.mxu0 %v397
        %409 = vmatpush.msra.mxu0 %v396
        %410 = vmatpush.msra.mxu0 %v395
        %411 = vmatpush.msra.mxu0 %v394
        %412 = vmatpush.msra.mxu0 %v393
        %413 = vmatpush.msra.mxu0 %v392
        %414 = vmatpush.msra.mxu0 %v391
        %415 = vmatpush.msra.mxu0 %v390
        %416 = vmatpush.msra.mxu0 %v389
        %417 = vmatpush.msra.mxu0 %v388
        %418 = vmatpush.msra.mxu0 %v387
        %419 = vmatmul.f32.gmra.mxu0 %v385
        %v420 = vpop.f32.mrf.mxu0
        %v421 = vadd.f32 0.0, %v420
        %422 = vdwg.mxu0
        %v423 = vadd.f32 %v386, %v421
        %424 = vst [vmem:[#allocation2] sm:$0xff] %v423
        // Predicated region
        $region53: #{_ffn_forward.1} parent=39 // pred_check
          %p425 = pneg %p296
        $region54: #{_ffn_forward.1} parent=39 // pred_check_branch
          %427 = sbr.rel (%p425) target = $region56
        $region55: #{_ffn_forward.1} parent=39 // pred_region
          %v428 = vld [vmem:[#allocation2] sm:$0xff]
          %v429 = vld [vmem:[%s4] sm:$0x1]
          %v431 = vperm.slane %v429, 0
          %v433 = vadd.f32 %v428, %v431
          %434 = vst [vmem:[%s295] sm:$0xff] %v433
        $region56: #{_ffn_forward.1} parent=39 // pred_fallthru
          _
        %p435 = scmp.lt.s32.totalorder %s22, 1
        %s436 = scalar_select %p435, %s22, 1
        %s437 = smul.addr %s436, 8
        %s438 = scalar_lea.vmem %s5, %s437
        // Predicated region
        $region57: #{_ffn_forward.1} parent=39 // pred_check
          %p439 = pneg %p173
        $region58: #{_ffn_forward.1} parent=39 // pred_check_branch
          %441 = sbr.rel (%p439) target = $region60
        $region59: #{_ffn_forward.1} parent=39 // pred_region
          _
        $region60: #{_ffn_forward.1} parent=39 // pred_fallthru
          _
      $region40: #{_ffn_forward.1} parent=5 // pred_fallthru
        _
      %p442 = scmp.le.s32.totalorder 2, %s13
      // Predicated region
      $region61: #{_ffn_forward.1} parent=5 // pred_check
        %p443 = pneg %p442
      $region62: #{_ffn_forward.1} parent=5 // pred_check_branch
        %445 = sbr.rel (%p443) target = $region64
      $region63: #{_ffn_forward.1} parent=5 // pred_region
        %s446 = ssub.s32 %s13, 2
        // Predicated region
        $region65: #{_ffn_forward.1} parent=63 // pred_check
          %p447 = pneg %p179
        $region66: #{_ffn_forward.1} parent=63 // pred_check_branch
          %449 = sbr.rel (%p447) target = $region68
        $region67: #{_ffn_forward.1} parent=63 // pred_region
          %p450 = scmp.lt.s32.totalorder %s24, 1
          %s451 = scalar_select %p450, %s24, 1
          %s452 = smul.addr %s451, 8
          %s453 = scalar_lea.vmem %s5, %s452
        $region68: #{_ffn_forward.1} parent=63 // pred_fallthru
          _
      $region64: #{_ffn_forward.1} parent=5 // pred_fallthru
        _
    $region6: #{_ffn_forward.1} parent=1 // loop_footer
      %s17 = sadd.s32 1, %s13
    $region7: #{_ffn_forward.1} parent=1 // loop_footer_branch
      %12 = sbr.rel target = $region3
    $region8: #{_ffn_forward.1} parent=1 // loop_exit
      _
    %454 = vsyncpa [#allocation4], 1
    %s455 = scalar_lea.sflag [#allocation4], 1
    %456 = vsyncpa %s455, 1
    %457 = vsyncpa [#allocation6], 1

</llo_original>
